<compile_context>
chip_gen: v5e
topology: v5e:2x2
jax: 0.10.0
libtpu: 0.0.40
codegen_flags: <defaults>
</compile_context>

<pallas_src>
import math

import jax
import jax.numpy as jnp
from jax.experimental import pallas as pl
from jax.experimental.pallas import tpu as pltpu


def _pe_add_kernel(x_ref, pe_ref, o_ref):
    # x_ref/o_ref: (TS, TB, TD); pe_ref: (TS, 1, TD) -> broadcasts over batch axis.
    o_ref[...] = (x_ref[...] + pe_ref[...]).astype(o_ref.dtype)


def make_positional_encoding(d_model: int, max_len: int = 5000,
                             dtype=jnp.float32) -> jnp.ndarray:
    """Builds the pe buffer exactly like the PyTorch __init__ ([max_len, 1, d_model])."""
    position = jnp.arange(max_len, dtype=jnp.float32)[:, None]              # (max_len, 1)
    div_term = jnp.exp(
        jnp.arange(0, d_model, 2, dtype=jnp.float32) * (-math.log(10000.0) / d_model)
    )                                                                        # (ceil(d/2),)
    angles = position * div_term                                             # (max_len, ceil(d/2))
    pe = jnp.zeros((max_len, 1, d_model), dtype=jnp.float32)
    pe = pe.at[:, 0, 0::2].set(jnp.sin(angles))
    pe = pe.at[:, 0, 1::2].set(jnp.cos(angles)[:, : d_model // 2])
    return pe.astype(dtype)


def _sublane_pack(itemsize: int) -> int:
    """Native sublane packing: 8 rows for f32, 16 for bf16/f16, 32 for int8/fp8."""
    return 8 * max(1, 4 // max(1, itemsize))


def _pick_tiles(seq_len: int, batch: int, d_model: int, itemsize: int,
                target_bytes: int) -> tuple[int, int, int]:
    """Pick (ts, tb, td): prefer tiling seq, then batch, then d_model.

    Blocked dims respect TPU layout rules: batch blocks are multiples of the
    dtype sublane packing, d_model blocks are multiples of 128 lanes; a dim
    left at its full extent has no alignment requirement.
    """
    pack = _sublane_pack(itemsize)

    def fits(ts, tb, td):
        return ts * tb * td * itemsize <= target_bytes

    # Whole array in one block: best for small shapes, no alignment constraints.
    if fits(seq_len, batch, d_model):
        return seq_len, batch, d_model

    # 1) Tile over seq only (keeps batch/d_model contiguous and lane-dense).
    ts = target_bytes // max(1, batch * d_model * itemsize)
    if ts >= pack:
        return min((ts // pack) * pack, seq_len), batch, d_model
    ts = min(pack, seq_len)

    # 2) Tile over batch as well (pack-multiple blocks only).
    tb = batch
    if batch > pack:
        tb = target_bytes // max(1, ts * d_model * itemsize)
        tb = min(max(pack, (tb // pack) * pack), batch)
    if fits(ts, tb, d_model) or d_model <= 128:
        return ts, tb, d_model

    # 3) Tile over d_model last (128-lane-multiple blocks) to cap VMEM (v7x).
    td = target_bytes // max(1, ts * tb * itemsize)
    td = min(max(128, (td // 128) * 128), d_model)
    return ts, tb, td


def positional_encoding_forward(x: jnp.ndarray, pe: jnp.ndarray,
                                target_tile_bytes: int = 4 * 1024 * 1024) -> jnp.ndarray:
    """x: [seq_len, batch, d_model]; pe: [max_len, 1, d_model]; returns x + pe[:seq_len]."""
    seq_len, batch, d_model = x.shape
    pe_s = pe[:seq_len]                                   # (S, 1, D)
    if pe_s.dtype != x.dtype:
        # TODO(synk): store pe in the activation dtype up front to avoid this per-call cast.
        pe_s = pe_s.astype(x.dtype)

    ts, tb, td = _pick_tiles(seq_len, batch, d_model, x.dtype.itemsize,
                             target_tile_bytes)
    grid = (pl.cdiv(seq_len, ts), pl.cdiv(batch, tb), pl.cdiv(d_model, td))

    return pl.pallas_call(
        _pe_add_kernel,
        out_shape=jax.ShapeDtypeStruct((seq_len, batch, d_model), x.dtype),
        grid_spec=pltpu.PrefetchScalarGridSpec(
            num_scalar_prefetch=0,
            grid=grid,
            in_specs=[
                pl.BlockSpec((ts, tb, td), lambda i, j, k: (i, j, k)),   # x
                pl.BlockSpec((ts, 1, td), lambda i, j, k: (i, 0, k)),    # pe (broadcast batch)
            ],
            out_specs=pl.BlockSpec((ts, tb, td), lambda i, j, k: (i, j, k)),
        ),
        compiler_params=pltpu.CompilerParams(
            dimension_semantics=("parallel", "parallel", "parallel"),
            vmem_limit_bytes=32 * 1024 * 1024,
        ),
    )(x, pe_s)


if __name__ == "__main__":
    key = jax.random.PRNGKey(0)

    # Case 1: module-docstring-like small shape, f32 -> single full-array block.
    d_model, max_len, seq_len, batch = 32, 64, 8, 2
    pe = make_positional_encoding(d_model, max_len=max_len)
    x = jax.random.normal(key, (seq_len, batch, d_model), dtype=jnp.float32)
    out = jax.block_until_ready(positional_encoding_forward(x, pe))
    ref = x + pe[:seq_len]
    assert out.shape == (seq_len, batch, d_model)
    assert jnp.allclose(out, ref, atol=1e-6), "f32 mismatch vs reference"

    # Case 2: bf16 activations with pe stored in bf16 (hoisted cast), small tile
    # budget forces a multi-step seq grid with dtype-aware 16-row tiles.
    d2, s2, b2 = 128, 64, 16
    pe2 = make_positional_encoding(d2, max_len=128, dtype=jnp.bfloat16)
    x2 = jax.random.normal(jax.random.PRNGKey(1), (s2, b2, d2), dtype=jnp.bfloat16)
    out2 = jax.block_until_ready(
        positional_encoding_forward(x2, pe2, target_tile_bytes=64 * 1024))
    ref2 = x2 + pe2[:s2]
    assert out2.shape == (s2, b2, d2)
    assert jnp.allclose(out2.astype(jnp.float32), ref2.astype(jnp.float32),
                        atol=1e-2), "bf16 mismatch vs reference"

    # Case 3: tiny tile budget forces tiling on all three axes (the bounded-VMEM
    # v7x safeguard path) -> grid (2, 8, 2) with (8, 8, 128) blocks.
    d3, s3, b3 = 256, 16, 64
    pe3 = make_positional_encoding(d3, max_len=32)
    x3 = jax.random.normal(jax.random.PRNGKey(2), (s3, b3, d3), dtype=jnp.float32)
    out3 = jax.block_until_ready(
        positional_encoding_forward(x3, pe3, target_tile_bytes=16 * 1024))
    ref3 = x3 + pe3[:s3]
    assert jnp.allclose(out3, ref3, atol=1e-6), "multi-axis-grid mismatch vs reference"

    print("KERNEL_OK")
</pallas_src>

<mosaic_0001>
module attributes {stable_mosaic.version = 11 : i64} {
  func.func @_pe_add_kernel(%arg0: i32, %arg1: i32, %arg2: i32, %arg3: memref<8x2x32xf32, #tpu.memory_space<vmem>>, %arg4: memref<8x1x32xf32, #tpu.memory_space<vmem>>, %arg5: memref<8x2x32xf32, #tpu.memory_space<vmem>>) attributes {dimension_semantics = [#tpu.dimension_semantics<parallel>, #tpu.dimension_semantics<parallel>, #tpu.dimension_semantics<parallel>], iteration_bounds = array<i64: 1, 1, 1>, scalar_prefetch = 0 : i64, scratch_operands = 0 : i64, tpu.core_type = #tpu.core_type<tc>, window_params = [{transform_indices = @transform_0, window_bounds = array<i64: 8, 2, 32>}, {transform_indices = @transform_1, window_bounds = array<i64: 8, 1, 32>}, {transform_indices = @transform_2, window_bounds = array<i64: 8, 2, 32>}]} {
    %c0 = arith.constant 0 : index
    %c0_0 = arith.constant 0 : index
    %c0_1 = arith.constant 0 : index
    %0 = vector.load %arg3[%c0, %c0_0, %c0_1] : memref<8x2x32xf32, #tpu.memory_space<vmem>>, vector<8x2x32xf32>
    %c0_2 = arith.constant 0 : index
    %c0_3 = arith.constant 0 : index
    %c0_4 = arith.constant 0 : index
    %1 = vector.load %arg4[%c0_2, %c0_3, %c0_4] : memref<8x1x32xf32, #tpu.memory_space<vmem>>, vector<8x1x32xf32>
    %2 = vector.broadcast %1 : vector<8x1x32xf32> to vector<8x2x32xf32>
    %3 = arith.addf %0, %2 : vector<8x2x32xf32>
    %c0_5 = arith.constant 0 : index
    %c0_6 = arith.constant 0 : index
    %c0_7 = arith.constant 0 : index
    %4 = vector.load %arg5[%c0_5, %c0_6, %c0_7] : memref<8x2x32xf32, #tpu.memory_space<vmem>>, vector<8x2x32xf32>
    tpu.vector_store %arg5[%c0_5, %c0_6, %c0_7], %3 {strides = array<i32>} : memref<8x2x32xf32, #tpu.memory_space<vmem>>, vector<8x2x32xf32>,
    return
  }
  func.func @transform_0(%arg0: i32, %arg1: i32, %arg2: i32) -> (i32, i32, i32) {
    %c0_i32 = arith.constant 0 : i32
    return %arg0, %arg1, %arg2 : i32, i32, i32
  }
  func.func @transform_1(%arg0: i32, %arg1: i32, %arg2: i32) -> (i32, i32, i32) {
    %c0_i32 = arith.constant 0 : i32
    %c0_i32_0 = arith.constant 0 : i32
    return %arg0, %c0_i32, %arg2 : i32, i32, i32
  }
  func.func @transform_2(%arg0: i32, %arg1: i32, %arg2: i32) -> (i32, i32, i32) {
    %c0_i32 = arith.constant 0 : i32
    return %arg0, %arg1, %arg2 : i32, i32, i32
  }
}

</mosaic_0001>

<llo_original>
// kernel: tpu_custom_call.1
$region0: #{tpu_custom_call.1}
  #allocation0 [shape = 'u32[]', space=smem, size = 0x4, offset = 0x4, fixed_abs, tag = 'smem constant byte address 0x4 - core index']
  #allocation1 [shape = 'u32[72,128]{1,0:T(1,128)}', space=vmem, size = 0x9000, scoped, tag = 'internal scratch']
  %s0 = inlined_call_operand.hbm [shape: f32[8,2,32], index: 0, kind: input, shape index: {}]
  %s1 = inlined_call_operand.hbm [shape: f32[8,1,32], index: 1, kind: input, shape index: {}]
  %s2 = inlined_call_operand.hbm [shape: f32[8,2,32], index: 2, kind: output, shape index: {}]
  %s3 = sld [smem:[#allocation0]]
  $region26: #{tpu_custom_call.1} parent=0
    _
  %s5 = ssub.s32 1, %s3
  %s6 = scalar_select 0, %s5, %s3
  $region1: #{tpu_custom_call.1} parent=0
    #allocation2 [shape = 'u8[8192]{0}', space=vmem, size = 0x2000, scoped, tag = 'input window, operand 0, single buffered']
    #allocation3 [shape = 's32[1]{0}', space=sflag, size = 0x4, scoped, tag = 'scoped memory for tpu_custom_call.1']
    #allocation4 [shape = 's32[1]{0}', space=sflag, size = 0x4, scoped, tag = 'scoped memory for tpu_custom_call.1']
    #allocation5 [shape = 'u8[4096]{0}', space=vmem, size = 0x1000, scoped, tag = 'input window, operand 1, single buffered']
    #allocation6 [shape = 's32[1]{0}', space=sflag, size = 0x4, scoped, tag = 'scoped memory for tpu_custom_call.1']
    #allocation7 [shape = 'u8[8192]{0}', space=vmem, size = 0x2000, scoped, tag = 'output window, operand 0, single buffered']
    %7 = vsyncpa [#allocation3], 0
    %8 = vsyncpa [#allocation6], 0
    %9 = vsyncpa [#allocation4], 0
    // Predicated region
    $region2: #{tpu_custom_call.1} parent=1 // pred_check
      _
    $region3: #{tpu_custom_call.1} parent=1 // pred_check_branch
      %11 = sbr.rel (0) target = $region5
    $region4: #{tpu_custom_call.1} parent=1 // pred_region
      %13 = vsyncadd [#allocation3], 0
      %s14 = sshll.u32 %s0, 4
      %s15 = int_to_ptr.hbm [resolvable:$true] %s14
      %s16 = sshll.u32 [#allocation2], 4
      %s17 = int_to_ptr.vmem [resolvable:$true] %s16
      %22 = dma.hbm_to_vmem [thread:$0]  %s15, 256, %s17, [#allocation3], 32, 32, 2
    $region5: #{tpu_custom_call.1} parent=1 // pred_fallthru
      _
    // Predicated region
    $region6: #{tpu_custom_call.1} parent=1 // pred_check
      _
    $region7: #{tpu_custom_call.1} parent=1 // pred_check_branch
      %24 = sbr.rel (0) target = $region9
    $region8: #{tpu_custom_call.1} parent=1 // pred_region
      %26 = vsyncadd [#allocation6], 0
      %s27 = sshll.u32 %s1, 4
      %s28 = int_to_ptr.hbm [resolvable:$true] %s27
      %s29 = sshll.u32 [#allocation5], 4
      %s30 = int_to_ptr.vmem [resolvable:$true] %s29
      %35 = dma.hbm_to_vmem [thread:$0]  %s28, 128, %s30, [#allocation6], 16, 16, 1
    $region9: #{tpu_custom_call.1} parent=1 // pred_fallthru
      _
    // Predicated region
    $region10: #{tpu_custom_call.1} parent=1 // pred_check
      _
    $region11: #{tpu_custom_call.1} parent=1 // pred_check_branch
      %37 = sbr.rel (0) target = $region13
    $region12: #{tpu_custom_call.1} parent=1 // pred_region
      %39 = dma.done [#allocation3], 256
    $region13: #{tpu_custom_call.1} parent=1 // pred_fallthru
      _
    // Predicated region
    $region14: #{tpu_custom_call.1} parent=1 // pred_check
      _
    $region15: #{tpu_custom_call.1} parent=1 // pred_check_branch
      %41 = sbr.rel (0) target = $region17
    $region16: #{tpu_custom_call.1} parent=1 // pred_region
      %43 = dma.done [#allocation6], 128
    $region17: #{tpu_custom_call.1} parent=1 // pred_fallthru
      _
    %v44 = vld [vmem:[#allocation2] sm:$0x3]
    %v45 = vld [vmem:[#allocation2 + $0x2] sm:$0x3]
    %v46 = vld [vmem:[#allocation2 + $0x4] sm:$0x3]
    %v47 = vld [vmem:[#allocation2 + $0x6] sm:$0x3]
    %v48 = vld [vmem:[#allocation2 + $0x8] sm:$0x3]
    %v49 = vld [vmem:[#allocation2 + $0xa] sm:$0x3]
    %v50 = vld [vmem:[#allocation2 + $0xc] sm:$0x3]
    %v51 = vld [vmem:[#allocation2 + $0xe] sm:$0x3]
    %v52 = vld [vmem:[#allocation5] sm:$0x1]
    %v53 = vld [vmem:[#allocation5 + $0x1] sm:$0x1]
    %v54 = vld [vmem:[#allocation5 + $0x2] sm:$0x1]
    %v55 = vld [vmem:[#allocation5 + $0x3] sm:$0x1]
    %v56 = vld [vmem:[#allocation5 + $0x4] sm:$0x1]
    %v57 = vld [vmem:[#allocation5 + $0x5] sm:$0x1]
    %v58 = vld [vmem:[#allocation5 + $0x6] sm:$0x1]
    %v59 = vld [vmem:[#allocation5 + $0x7] sm:$0x1]
    %v68 = vperm.slane %v52, 0
    %v69 = vperm.slane %v53, 0
    %v70 = vperm.slane %v54, 0
    %v71 = vperm.slane %v55, 0
    %v72 = vperm.slane %v56, 0
    %v73 = vperm.slane %v57, 0
    %v74 = vperm.slane %v58, 0
    %v75 = vperm.slane %v59, 0
    %v84 = vadd.f32 %v44, %v68
    %v85 = vadd.f32 %v45, %v69
    %v86 = vadd.f32 %v46, %v70
    %v87 = vadd.f32 %v47, %v71
    %v88 = vadd.f32 %v48, %v72
    %v89 = vadd.f32 %v49, %v73
    %v90 = vadd.f32 %v50, %v74
    %v91 = vadd.f32 %v51, %v75
    %vm92 = vcmask 254976
    %93 = vst.msk [vmem:[#allocation7] sm:$0x3] %vm92, %v84
    %94 = vst.msk [vmem:[#allocation7 + $0x2] sm:$0x3] %vm92, %v85
    %95 = vst.msk [vmem:[#allocation7 + $0x4] sm:$0x3] %vm92, %v86
    %96 = vst.msk [vmem:[#allocation7 + $0x6] sm:$0x3] %vm92, %v87
    %97 = vst.msk [vmem:[#allocation7 + $0x8] sm:$0x3] %vm92, %v88
    %98 = vst.msk [vmem:[#allocation7 + $0xa] sm:$0x3] %vm92, %v89
    %99 = vst.msk [vmem:[#allocation7 + $0xc] sm:$0x3] %vm92, %v90
    %100 = vst.msk [vmem:[#allocation7 + $0xe] sm:$0x3] %vm92, %v91
    // Predicated region
    $region18: #{tpu_custom_call.1} parent=1 // pred_check
      _
    $region19: #{tpu_custom_call.1} parent=1 // pred_check_branch
      %102 = sbr.rel (0) target = $region21
    $region20: #{tpu_custom_call.1} parent=1 // pred_region
      %104 = vsyncadd [#allocation4], 0
      %s105 = sshll.u32 [#allocation7], 4
      %s106 = int_to_ptr.vmem [resolvable:$true] %s105
      %s107 = sshll.u32 %s2, 4
      %s108 = int_to_ptr.hbm [resolvable:$true] %s107
      %113 = dma.vmem_to_hbm [thread:$0]  %s106, 256, %s108, [#allocation4], 32, 32, 2
    $region21: #{tpu_custom_call.1} parent=1 // pred_fallthru
      _
    // Predicated region
    $region22: #{tpu_custom_call.1} parent=1 // pred_check
      _
    $region23: #{tpu_custom_call.1} parent=1 // pred_check_branch
      %115 = sbr.rel (0) target = $region25
    $region24: #{tpu_custom_call.1} parent=1 // pred_region
      %117 = dma.done [#allocation4], 256
    $region25: #{tpu_custom_call.1} parent=1 // pred_fallthru
      _
    %118 = vsyncpa [#allocation3], 1
    %119 = vsyncpa [#allocation6], 1
    %120 = vsyncpa [#allocation4], 1

</llo_original>
